<compile_context>
chip_gen: v6e
topology: v6e:2x2x1
jax: 0.10.0
libtpu: 0.0.40
codegen_flags: <defaults>
</compile_context>

<pallas_src>
import functools

import jax
import jax.numpy as jnp
from jax.experimental import pallas as pl
from jax.experimental.pallas import tpu as pltpu

H1 = 20        # fc1 output width
H2 = 20        # fc2 output width
OUT = 6        # fc5 output width
LANES = 128    # lane width of the packed weight slab / hidden activations
HPAD = 128     # hidden widths zero-padded to full lane width
OUT_PAD = 8    # sublane-padded row count of the transposed output


def _round_up(a, m):
    return (a + m - 1) // m * m


def _slab_offsets(input_size):
    """8-aligned row offsets of each parameter block inside the weight slab."""
    off_w1 = 0
    off_b1 = _round_up(input_size, 8)
    off_w2 = off_b1 + 8
    off_b2 = off_w2 + HPAD
    off_w3 = off_b2 + 8
    off_b3 = off_w3 + HPAD
    rows = off_b3 + 8
    return (off_w1, off_b1, off_w2, off_b2, off_w3, off_b3), rows


def pack_params(params, input_size):
    """Pack w1,b1,w2,b2,w3,b3 into ONE (rows, 128) f32 slab.

    Each block is zero-padded to the full 128-lane width (hidden-layer weights
    also to 128 rows) so every MXU operand in the kernel is full-lane; the
    zero padding contributes exactly 0 through the ReLUs.  Pack ONCE and reuse
    the slab across forward calls.
    """
    (o_w1, o_b1, o_w2, o_b2, o_w3, o_b3), rows = _slab_offsets(input_size)
    slab = jnp.zeros((rows, LANES), jnp.float32)
    slab = slab.at[o_w1:o_w1 + input_size, 0:H1].set(params["w1"])
    slab = slab.at[o_b1, 0:H1].set(params["b1"])
    slab = slab.at[o_w2:o_w2 + H1, 0:H2].set(params["w2"])
    slab = slab.at[o_b2, 0:H2].set(params["b2"])
    slab = slab.at[o_w3:o_w3 + H2, 0:OUT].set(params["w3"])
    slab = slab.at[o_b3, 0:OUT].set(params["b3"])
    return slab


def mlp_kernel(x_ref, w_ref, o_ref, *, in_size, off):
    """One batch tile: (TB, in_size) @ packed weights -> transposed (8, TB)."""
    o_w1, o_b1, o_w2, o_b2, o_w3, o_b3 = off

    x = x_ref[...]                                   # (TB, in_size)

    # Full-lane (..., 128) static slices of the resident weight slab.
    w1 = w_ref[o_w1:o_w1 + in_size, :]               # (in_size, 128)
    b1 = w_ref[o_b1:o_b1 + 1, :]                     # (1, 128)
    w2 = w_ref[o_w2:o_w2 + HPAD, :]                  # (128, 128)
    b2 = w_ref[o_b2:o_b2 + 1, :]                     # (1, 128)
    w3 = w_ref[o_w3:o_w3 + HPAD, :]                  # (128, 128)
    b3 = w_ref[o_b3:o_b3 + 1, :]                     # (1, 128)

    h1 = jnp.maximum(
        jnp.dot(x, w1, preferred_element_type=jnp.float32) + b1, 0.0)
    h2 = jnp.maximum(
        jnp.dot(h1, w2, preferred_element_type=jnp.float32) + b2, 0.0)
    z = jnp.dot(h2, w3, preferred_element_type=jnp.float32) + b3    # (TB, 128)

    # Lane-dense store: transpose (XLU slot, overlaps with MXU/DMA) so the
    # output block is (8, TB) with the batch in lanes; rows 0:6 carry data.
    zt = jnp.transpose(z)                            # (128, TB)
    # Exact sigmoid: exp runs on the EUP; keeps 1e-5 match with the reference.
    o_ref[...] = (1.0 / (1.0 + jnp.exp(-zt[0:OUT_PAD, :]))).astype(o_ref.dtype)


def _pick_tile(B, block_b):
    """Rows per grid step; must be a multiple of 128 (lane dim of the
    transposed output block)."""
    if B < 128:
        return 128                        # tiny batch: wrapper pads a few rows
    cap = (B // 128) * 128                # largest tile needing no wrapper pad
    if B <= block_b:
        return cap
    steps = -(-B // block_b)
    steps += steps % 2                    # even step count -> balanced v7x split
    return min(_round_up(-(-B // steps), 128), cap)


def your_model_forward(x, slab, *, block_b=2048):
    """x: (B, input_size) float32; slab: packed weights from pack_params().

    Weights are stored pre-transposed as (in_features, out_features) so the
    kernel computes x @ W + b (same math as PyTorch nn.Linear).
    """
    B, in_size = x.shape
    off, rows = _slab_offsets(in_size)
    assert slab.shape == (rows, LANES), "slab does not match input_size"

    tb = _pick_tile(B, block_b)
    if tb > B:                            # only when B < 128: tiny pad copy
        bk = tb
        x_k = jnp.zeros((bk, in_size), x.dtype).at[:B].set(x)
    else:                                 # no wrapper copy of x
        bk = B
        x_k = x

    grid = (pl.cdiv(bk, tb),)
    kernel = functools.partial(mlp_kernel, in_size=in_size, off=off)

    out_t = pl.pallas_call(
        kernel,
        out_shape=jax.ShapeDtypeStruct((OUT_PAD, bk), jnp.float32),
        grid_spec=pltpu.PrefetchScalarGridSpec(
            num_scalar_prefetch=0,
            grid=grid,
            in_specs=[
                pl.BlockSpec((tb, in_size), lambda i: (i, 0)),   # x: batch-tiled
                pl.BlockSpec(slab.shape, lambda i: (0, 0)),      # weights: resident
            ],
            out_specs=pl.BlockSpec((OUT_PAD, tb), lambda i: (0, i)),
        ),
        compiler_params=pltpu.CompilerParams(
            dimension_semantics=("parallel",),
            vmem_limit_bytes=32 * 1024 * 1024,
        ),
    )(x_k, slab)

    # (8, bk) -> (B, 6): drop padded rows/columns, restore row-major layout.
    return out_t[:OUT, :B].T


def init_params(key, input_size):
    """Deterministic init mirroring nn.Linear default (uniform +/- 1/sqrt(fan_in))."""
    ks = jax.random.split(key, 6)

    def linear(kw, kb, fan_in, fan_out):
        bound = 1.0 / jnp.sqrt(fan_in)
        # stored as (in, out) — transposed vs. PyTorch's (out, in)
        w = jax.random.uniform(kw, (fan_in, fan_out), jnp.float32, -bound, bound)
        b = jax.random.uniform(kb, (fan_out,), jnp.float32, -bound, bound)
        return w, b

    w1, b1 = linear(ks[0], ks[1], input_size, H1)
    w2, b2 = linear(ks[2], ks[3], H1, H2)
    w3, b3 = linear(ks[4], ks[5], H2, OUT)
    return {"w1": w1, "b1": b1, "w2": w2, "b2": b2, "w3": w3, "b3": b3}


def _ref(x, p):
    h1 = jnp.maximum(x @ p["w1"] + p["b1"], 0.0)
    h2 = jnp.maximum(h1 @ p["w2"] + p["b2"], 0.0)
    return jax.nn.sigmoid(h2 @ p["w3"] + p["b3"])


if __name__ == "__main__":
    key = jax.random.PRNGKey(0)
    kx, kp, kx2, kx3 = jax.random.split(key, 4)

    input_size = 32
    params = init_params(kp, input_size)
    slab = pack_params(params, input_size)     # packed once, reused (hoisted)

    # 1) tiny batch (single padded tile).
    batch = 2
    x = jax.random.normal(kx, (batch, input_size), dtype=jnp.float32)
    out = your_model_forward(x, slab)
    jax.block_until_ready(out)
    assert out.shape == (batch, OUT)
    assert jnp.allclose(out, _ref(x, params), atol=1e-5, rtol=1e-5)

    # 2) mid batch: no wrapper copy, ragged last block.
    batch2 = 300
    x2 = jax.random.normal(kx2, (batch2, input_size), dtype=jnp.float32)
    out2 = your_model_forward(x2, slab)
    jax.block_until_ready(out2)
    assert out2.shape == (batch2, OUT)
    assert jnp.allclose(out2, _ref(x2, params), atol=1e-5, rtol=1e-5)

    # 3) multi-tile batch: exercises the batch grid + even (v7x-balanced) split.
    batch3 = 2050
    x3 = jax.random.normal(kx3, (batch3, input_size), dtype=jnp.float32)
    out3 = your_model_forward(x3, slab)
    jax.block_until_ready(out3)
    assert out3.shape == (batch3, OUT)
    assert jnp.allclose(out3, _ref(x3, params), atol=1e-5, rtol=1e-5)

    print("KERNEL_OK")
</pallas_src>

<mosaic_0001>
module attributes {stable_mosaic.version = 11 : i64} {
  func.func @mlp_kernel(%arg0: i32, %arg1: memref<128x32xf32, #tpu.memory_space<vmem>>, %arg2: memref<312x128xf32, #tpu.memory_space<vmem>>, %arg3: memref<8x128xf32, #tpu.memory_space<vmem>>) attributes {dimension_semantics = [#tpu.dimension_semantics<parallel>], iteration_bounds = array<i64: 1>, scalar_prefetch = 0 : i64, scratch_operands = 0 : i64, tpu.core_type = #tpu.core_type<tc>, window_params = [{transform_indices = @transform_0, window_bounds = array<i64: 128, 32>}, {pipeline_mode = #tpu.pipeline_mode<synchronous>, transform_indices = @transform_1, window_bounds = array<i64: 312, 128>}, {transform_indices = @transform_2, window_bounds = array<i64: 8, 128>}]} {
    %c0 = arith.constant 0 : index
    %c0_0 = arith.constant 0 : index
    %0 = vector.load %arg1[%c0, %c0_0] : memref<128x32xf32, #tpu.memory_space<vmem>>, vector<128x32xf32>
    %c0_1 = arith.constant 0 : index
    %c0_2 = arith.constant 0 : index
    %1 = vector.load %arg2[%c0_1, %c0_2] : memref<312x128xf32, #tpu.memory_space<vmem>>, vector<32x128xf32>
    %c32 = arith.constant 32 : index
    %c0_3 = arith.constant 0 : index
    %2 = vector.load %arg2[%c32, %c0_3] : memref<312x128xf32, #tpu.memory_space<vmem>>, vector<1x128xf32>
    %c40 = arith.constant 40 : index
    %c0_4 = arith.constant 0 : index
    %3 = vector.load %arg2[%c40, %c0_4] : memref<312x128xf32, #tpu.memory_space<vmem>>, vector<128x128xf32>
    %c168 = arith.constant 168 : index
    %c0_5 = arith.constant 0 : index
    %4 = vector.load %arg2[%c168, %c0_5] : memref<312x128xf32, #tpu.memory_space<vmem>>, vector<1x128xf32>
    %c176 = arith.constant 176 : index
    %c0_6 = arith.constant 0 : index
    %5 = vector.load %arg2[%c176, %c0_6] : memref<312x128xf32, #tpu.memory_space<vmem>>, vector<128x128xf32>
    %c304 = arith.constant 304 : index
    %c0_7 = arith.constant 0 : index
    %6 = vector.load %arg2[%c304, %c0_7] : memref<312x128xf32, #tpu.memory_space<vmem>>, vector<1x128xf32>
    %cst = arith.constant dense<0.000000e+00> : vector<128x128xf32>
    %7 = tpu.matmul %0, %1, %cst {dimension_numbers = #tpu.dot_dimension_numbers<[1], [0], [0], [1], [0, 0, 1, 1], [], []>} : vector<128x32xf32>, vector<32x128xf32>, vector<128x128xf32> -> vector<128x128xf32>
    %8 = vector.broadcast %2 : vector<1x128xf32> to vector<128x128xf32>
    %9 = arith.addf %7, %8 : vector<128x128xf32>
    %cst_8 = arith.constant 0.000000e+00 : f32
    %10 = vector.broadcast %cst_8 : f32 to vector<128x128xf32>
    %11 = arith.maximumf %9, %10 : vector<128x128xf32>
    %cst_9 = arith.constant dense<0.000000e+00> : vector<128x128xf32>
    %12 = tpu.matmul %11, %3, %cst_9 {dimension_numbers = #tpu.dot_dimension_numbers<[1], [0], [0], [1], [0, 0, 1, 1], [], []>} : vector<128x128xf32>, vector<128x128xf32>, vector<128x128xf32> -> vector<128x128xf32>
    %13 = vector.broadcast %4 : vector<1x128xf32> to vector<128x128xf32>
    %14 = arith.addf %12, %13 : vector<128x128xf32>
    %cst_10 = arith.constant 0.000000e+00 : f32
    %15 = vector.broadcast %cst_10 : f32 to vector<128x128xf32>
    %16 = arith.maximumf %14, %15 : vector<128x128xf32>
    %cst_11 = arith.constant dense<0.000000e+00> : vector<128x128xf32>
    %17 = tpu.matmul %16, %5, %cst_11 {dimension_numbers = #tpu.dot_dimension_numbers<[1], [0], [0], [1], [0, 0, 1, 1], [], []>} : vector<128x128xf32>, vector<128x128xf32>, vector<128x128xf32> -> vector<128x128xf32>
    %18 = vector.broadcast %6 : vector<1x128xf32> to vector<128x128xf32>
    %19 = arith.addf %17, %18 : vector<128x128xf32>
    %20 = tpu.transpose %19, [1, 0] : vector<128x128xf32> -> vector<128x128xf32>
    %21 = vector.extract_strided_slice %20 {offsets = [0, 0], sizes = [8, 128], strides = [1, 1]} : vector<128x128xf32> to vector<8x128xf32>
    %cst_12 = arith.constant 0.000000e+00 : f32
    %22 = vector.broadcast %cst_12 : f32 to vector<8x128xf32>
    %23 = arith.subf %22, %21 : vector<8x128xf32>
    %24 = math.exp %23 : vector<8x128xf32>
    %cst_13 = arith.constant 1.000000e+00 : f32
    %25 = vector.broadcast %cst_13 : f32 to vector<8x128xf32>
    %26 = arith.addf %25, %24 : vector<8x128xf32>
    %cst_14 = arith.constant 1.000000e+00 : f32
    %27 = vector.broadcast %cst_14 : f32 to vector<8x128xf32>
    %28 = arith.divf %27, %26 : vector<8x128xf32>
    %c0_15 = arith.constant 0 : index
    %c0_16 = arith.constant 0 : index
    %29 = vector.load %arg3[%c0_15, %c0_16] : memref<8x128xf32, #tpu.memory_space<vmem>>, vector<8x128xf32>
    tpu.vector_store %arg3[%c0_15, %c0_16], %28 {strides = array<i32>} : memref<8x128xf32, #tpu.memory_space<vmem>>, vector<8x128xf32>,
    return
  }
  func.func @transform_0(%arg0: i32) -> (i32, i32) {
    %c0_i32 = arith.constant 0 : i32
    %c0_i32_0 = arith.constant 0 : i32
    return %arg0, %c0_i32 : i32, i32
  }
  func.func @transform_1(%arg0: i32) -> (i32, i32) {
    %c0_i32 = arith.constant 0 : i32
    %c0_i32_0 = arith.constant 0 : i32
    %c0_i32_1 = arith.constant 0 : i32
    return %c0_i32, %c0_i32_0 : i32, i32
  }
  func.func @transform_2(%arg0: i32) -> (i32, i32) {
    %c0_i32 = arith.constant 0 : i32
    %c0_i32_0 = arith.constant 0 : i32
    return %c0_i32, %arg0 : i32, i32
  }
}

</mosaic_0001>

<llo_original>
// kernel: tpu_custom_call.1
$region0: #{tpu_custom_call.1}
  #allocation0 [shape = 'u32[]', space=smem, size = 0x4, offset = 0x4, fixed_abs, tag = 'smem constant byte address 0x4 - core index']
  #allocation1 [shape = 'u32[144,128]{1,0:T(1,128)}', space=vmem, size = 0x12000, scoped, tag = 'internal scratch']
  %s0 = inlined_call_operand.vmem [shape: f32[128,32], index: 0, kind: input, shape index: {}]
  %s1 = inlined_call_operand.hbm [shape: f32[312,128], index: 1, kind: input, shape index: {}]
  %s2 = inlined_call_operand.hbm [shape: f32[8,128], index: 2, kind: output, shape index: {}]
  %s3 = sld [smem:[#allocation0]]
  $region22: #{tpu_custom_call.1} parent=0
    _
  %s5 = ssub.s32 1, %s3
  %s6 = scalar_select 0, %s5, %s3
  $region1: #{tpu_custom_call.1} parent=0
    #allocation2 [shape = 'u8[159744]{0}', space=vmem, size = 0x27000, scoped, tag = 'input window, operand 1, single buffered']
    #allocation3 [shape = 's32[1]{0}', space=sflag, size = 0x4, scoped, tag = 'scoped memory for tpu_custom_call.1']
    #allocation4 [shape = 's32[1]{0}', space=sflag, size = 0x4, scoped, tag = 'scoped memory for tpu_custom_call.1']
    #allocation5 [shape = 'u8[4096]{0}', space=vmem, size = 0x1000, scoped, tag = 'output window, operand 0, single buffered']
    %7 = vsyncpa [#allocation3], 0
    %8 = vsyncpa [#allocation4], 0
    // Predicated region
    $region2: #{tpu_custom_call.1} parent=1 // pred_check
      _
    $region3: #{tpu_custom_call.1} parent=1 // pred_check_branch
      %10 = sbr.rel (0) target = $region5
    $region4: #{tpu_custom_call.1} parent=1 // pred_region
      _
    $region5: #{tpu_custom_call.1} parent=1 // pred_fallthru
      _
    // Predicated region
    $region6: #{tpu_custom_call.1} parent=1 // pred_check
      _
    $region7: #{tpu_custom_call.1} parent=1 // pred_check_branch
      %12 = sbr.rel (0) target = $region9
    $region8: #{tpu_custom_call.1} parent=1 // pred_region
      %s14 = ssub.s32 4992, 4992
      %15 = vsyncadd [#allocation3], %s14
      %s16 = sshll.u32 [#allocation2], 4
      %s17 = int_to_ptr.vmem [resolvable:$true] %s16
      %22 = dma.hbm_to_vmem [thread:$0]  %s1, 4992, %s17, [#allocation3], 128, 128, 8
    $region9: #{tpu_custom_call.1} parent=1 // pred_fallthru
      _
    // Predicated region
    $region10: #{tpu_custom_call.1} parent=1 // pred_check
      _
    $region11: #{tpu_custom_call.1} parent=1 // pred_check_branch
      %24 = sbr.rel (0) target = $region13
    $region12: #{tpu_custom_call.1} parent=1 // pred_region
      %25 = dma.done [#allocation3], 4992
    $region13: #{tpu_custom_call.1} parent=1 // pred_fallthru
      _
    %v26 = vld [vmem:[%s0] sm:$0xff]
    %v27 = vld [vmem:[%s0 + $0x8] sm:$0xff]
    %v28 = vld [vmem:[%s0 + $0x10] sm:$0xff]
    %v29 = vld [vmem:[%s0 + $0x18] sm:$0xff]
    %v30 = vld [vmem:[%s0 + $0x20] sm:$0xff]
    %v31 = vld [vmem:[%s0 + $0x28] sm:$0xff]
    %v32 = vld [vmem:[%s0 + $0x30] sm:$0xff]
    %v33 = vld [vmem:[%s0 + $0x38] sm:$0xff]
    %v34 = vld [vmem:[%s0 + $0x40] sm:$0xff]
    %v35 = vld [vmem:[%s0 + $0x48] sm:$0xff]
    %v36 = vld [vmem:[%s0 + $0x50] sm:$0xff]
    %v37 = vld [vmem:[%s0 + $0x58] sm:$0xff]
    %v38 = vld [vmem:[%s0 + $0x60] sm:$0xff]
    %v39 = vld [vmem:[%s0 + $0x68] sm:$0xff]
    %v40 = vld [vmem:[%s0 + $0x70] sm:$0xff]
    %v41 = vld [vmem:[%s0 + $0x78] sm:$0xff]
    %v42 = vld [vmem:[#allocation2] sm:$0xff]
    %v43 = vld [vmem:[#allocation2 + $0x8] sm:$0xff]
    %v44 = vld [vmem:[#allocation2 + $0x10] sm:$0xff]
    %v45 = vld [vmem:[#allocation2 + $0x18] sm:$0xff]
    %v46 = vld [vmem:[#allocation2 + $0x20] sm:$0x1]
    %v47 = vld [vmem:[#allocation2 + $0x28] sm:$0xff]
    %v48 = vld [vmem:[#allocation2 + $0x30] sm:$0xff]
    %v49 = vld [vmem:[#allocation2 + $0x38] sm:$0xff]
    %v50 = vld [vmem:[#allocation2 + $0x40] sm:$0xff]
    %v51 = vld [vmem:[#allocation2 + $0x48] sm:$0xff]
    %v52 = vld [vmem:[#allocation2 + $0x50] sm:$0xff]
    %v53 = vld [vmem:[#allocation2 + $0x58] sm:$0xff]
    %v54 = vld [vmem:[#allocation2 + $0x60] sm:$0xff]
    %v55 = vld [vmem:[#allocation2 + $0x68] sm:$0xff]
    %v56 = vld [vmem:[#allocation2 + $0x70] sm:$0xff]
    %v57 = vld [vmem:[#allocation2 + $0x78] sm:$0xff]
    %v58 = vld [vmem:[#allocation2 + $0x80] sm:$0xff]
    %v59 = vld [vmem:[#allocation2 + $0x88] sm:$0xff]
    %v60 = vld [vmem:[#allocation2 + $0x90] sm:$0xff]
    %v61 = vld [vmem:[#allocation2 + $0x98] sm:$0xff]
    %v62 = vld [vmem:[#allocation2 + $0xa0] sm:$0xff]
    %v63 = vld [vmem:[#allocation2 + $0xa8] sm:$0x1]
    %v64 = vld [vmem:[#allocation2 + $0xb0] sm:$0xff]
    %v65 = vld [vmem:[#allocation2 + $0xb8] sm:$0xff]
    %v66 = vld [vmem:[#allocation2 + $0xc0] sm:$0xff]
    %v67 = vld [vmem:[#allocation2 + $0xc8] sm:$0xff]
    %v68 = vld [vmem:[#allocation2 + $0xd0] sm:$0xff]
    %v69 = vld [vmem:[#allocation2 + $0xd8] sm:$0xff]
    %v70 = vld [vmem:[#allocation2 + $0xe0] sm:$0xff]
    %v71 = vld [vmem:[#allocation2 + $0xe8] sm:$0xff]
    %v72 = vld [vmem:[#allocation2 + $0xf0] sm:$0xff]
    %v73 = vld [vmem:[#allocation2 + $0xf8] sm:$0xff]
    %v74 = vld [vmem:[#allocation2 + $0x100] sm:$0xff]
    %v75 = vld [vmem:[#allocation2 + $0x108] sm:$0xff]
    %v76 = vld [vmem:[#allocation2 + $0x110] sm:$0xff]
    %v77 = vld [vmem:[#allocation2 + $0x118] sm:$0xff]
    %v78 = vld [vmem:[#allocation2 + $0x120] sm:$0xff]
    %v79 = vld [vmem:[#allocation2 + $0x128] sm:$0xff]
    %v80 = vld [vmem:[#allocation2 + $0x130] sm:$0x1]
    %v81 = vlaneseq
    %v82 = vshrl.u32 %v81, 7
    %v83 = vsub.s32 0, %v82
    %v84 = vrot.slane %v46, %v83
    %vm85 = vcmask 261120
    %v87 = vsel %vm85, %v26, 0
    %v90 = vsel %vm85, %v27, 0
    %v93 = vsel %vm85, %v28, 0
    %v96 = vsel %vm85, %v29, 0
    %v99 = vsel %vm85, %v30, 0
    %v102 = vsel %vm85, %v31, 0
    %v105 = vsel %vm85, %v32, 0
    %v108 = vsel %vm85, %v33, 0
    %v111 = vsel %vm85, %v34, 0
    %v114 = vsel %vm85, %v35, 0
    %v117 = vsel %vm85, %v36, 0
    %v120 = vsel %vm85, %v37, 0
    %v123 = vsel %vm85, %v38, 0
    %v126 = vsel %vm85, %v39, 0
    %v129 = vsel %vm85, %v40, 0
    %v132 = vsel %vm85, %v41, 0
    %134 = vmatprep.subr.mxu0 0.0
    %135 = vmatpush1.msra.mxu0 0.0
    %136 = vmatprep.subr.mxu0 0.0
    %137 = vmatpush1.msra.mxu0 0.0
    %138 = vmatprep.subr.mxu0 0.0
    %139 = vmatpush1.msra.mxu0 0.0
    %140 = vmatprep.subr.mxu0 0.0
    %141 = vmatpush1.msra.mxu0 0.0
    %142 = vmatprep.subr.mxu0 0.0
    %143 = vmatpush1.msra.mxu0 0.0
    %144 = vmatprep.subr.mxu0 0.0
    %145 = vmatpush1.msra.mxu0 0.0
    %146 = vmatprep.subr.mxu0 0.0
    %147 = vmatpush1.msra.mxu0 0.0
    %148 = vmatprep.subr.mxu0 0.0
    %149 = vmatpush1.msra.mxu0 0.0
    %150 = vmatprep.subr.mxu0 0.0
    %151 = vmatpush1.msra.mxu0 0.0
    %152 = vmatprep.subr.mxu0 0.0
    %153 = vmatpush1.msra.mxu0 0.0
    %154 = vmatprep.subr.mxu0 0.0
    %155 = vmatpush1.msra.mxu0 0.0
    %156 = vmatprep.subr.mxu0 0.0
    %157 = vmatpush1.msra.mxu0 0.0
    %158 = vmatprep.subr.mxu0 0.0
    %159 = vmatpush1.msra.mxu0 %v45
    %160 = vmatprep.subr.mxu0 0.0
    %161 = vmatpush1.msra.mxu0 %v44
    %162 = vmatprep.subr.mxu0 0.0
    %163 = vmatpush1.msra.mxu0 %v43
    %164 = vmatprep.subr.mxu0 0.0
    %165 = vmatpush1.msra.mxu0 %v42
    %166 = vmatprep.subr.mxu0 0.0
    %167 = vmatpush2.msra.mxu0 0.0
    %168 = vmatprep.subr.mxu0 0.0
    %169 = vmatpush2.msra.mxu0 0.0
    %170 = vmatprep.subr.mxu0 0.0
    %171 = vmatpush2.msra.mxu0 0.0
    %172 = vmatprep.subr.mxu0 0.0
    %173 = vmatpush2.msra.mxu0 0.0
    %174 = vmatprep.subr.mxu0 0.0
    %175 = vmatpush2.msra.mxu0 0.0
    %176 = vmatprep.subr.mxu0 0.0
    %177 = vmatpush2.msra.mxu0 0.0
    %178 = vmatprep.subr.mxu0 0.0
    %179 = vmatpush2.msra.mxu0 0.0
    %180 = vmatprep.subr.mxu0 0.0
    %181 = vmatpush2.msra.mxu0 0.0
    %182 = vmatprep.subr.mxu0 0.0
    %183 = vmatpush2.msra.mxu0 0.0
    %184 = vmatprep.subr.mxu0 0.0
    %185 = vmatpush2.msra.mxu0 0.0
    %186 = vmatprep.subr.mxu0 0.0
    %187 = vmatpush2.msra.mxu0 0.0
    %188 = vmatprep.subr.mxu0 0.0
    %189 = vmatpush2.msra.mxu0 0.0
    %190 = vmatprep.subr.mxu0 0.0
    %191 = vmatpush2.msra.mxu0 0.0
    %192 = vmatprep.subr.mxu0 0.0
    %193 = vmatpush2.msra.mxu0 0.0
    %194 = vmatprep.subr.mxu0 0.0
    %195 = vmatpush2.msra.mxu0 0.0
    %196 = vmatprep.subr.mxu0 0.0
    %197 = vmatpush2.msra.mxu0 0.0
    %198 = vmatprep.mubr.f32.mxu0 0.0
    %199 = vmatmul.mubr.f32.gmra.mxu0 %v87
    %v200 = vpop.f32.mrf.mxu0
    %v201 = vadd.f32 %v84, %v200
    %v202 = vpop.f32.mrf.mxu0
    %203 = vmatprep.mubr.f32.mxu0 0.0
    %204 = vmatmul.mubr.f32.gmra.mxu0 %v90
    %v205 = vpop.f32.mrf.mxu0
    %v206 = vadd.f32 %v84, %v205
    %v207 = vpop.f32.mrf.mxu0
    %208 = vmatprep.mubr.f32.mxu0 0.0
    %209 = vmatmul.mubr.f32.gmra.mxu0 %v93
    %v210 = vpop.f32.mrf.mxu0
    %v211 = vadd.f32 %v84, %v210
    %v212 = vpop.f32.mrf.mxu0
    %213 = vmatprep.mubr.f32.mxu0 0.0
    %214 = vmatmul.mubr.f32.gmra.mxu0 %v96
    %v215 = vpop.f32.mrf.mxu0
    %v216 = vadd.f32 %v84, %v215
    %v217 = vpop.f32.mrf.mxu0
    %218 = vmatprep.mubr.f32.mxu0 0.0
    %219 = vmatmul.mubr.f32.gmra.mxu0 %v99
    %v220 = vpop.f32.mrf.mxu0
    %v221 = vadd.f32 %v84, %v220
    %v222 = vpop.f32.mrf.mxu0
    %223 = vmatprep.mubr.f32.mxu0 0.0
    %224 = vmatmul.mubr.f32.gmra.mxu0 %v102
    %v225 = vpop.f32.mrf.mxu0
    %v226 = vadd.f32 %v84, %v225
    %v227 = vpop.f32.mrf.mxu0
    %228 = vmatprep.mubr.f32.mxu0 0.0
    %229 = vmatmul.mubr.f32.gmra.mxu0 %v105
    %v230 = vpop.f32.mrf.mxu0
    %v231 = vadd.f32 %v84, %v230
    %v232 = vpop.f32.mrf.mxu0
    %233 = vmatprep.mubr.f32.mxu0 0.0
    %234 = vmatmul.mubr.f32.gmra.mxu0 %v108
    %v235 = vpop.f32.mrf.mxu0
    %v236 = vadd.f32 %v84, %v235
    %v237 = vpop.f32.mrf.mxu0
    %238 = vmatprep.mubr.f32.mxu0 0.0
    %239 = vmatmul.mubr.f32.gmra.mxu0 %v111
    %v240 = vpop.f32.mrf.mxu0
    %v241 = vadd.f32 %v84, %v240
    %v242 = vpop.f32.mrf.mxu0
    %243 = vmatprep.mubr.f32.mxu0 0.0
    %244 = vmatmul.mubr.f32.gmra.mxu0 %v114
    %v245 = vpop.f32.mrf.mxu0
    %v246 = vadd.f32 %v84, %v245
    %v247 = vpop.f32.mrf.mxu0
    %248 = vmatprep.mubr.f32.mxu0 0.0
    %249 = vmatmul.mubr.f32.gmra.mxu0 %v117
    %v250 = vpop.f32.mrf.mxu0
    %v251 = vadd.f32 %v84, %v250
    %v252 = vpop.f32.mrf.mxu0
    %253 = vmatprep.mubr.f32.mxu0 0.0
    %254 = vmatmul.mubr.f32.gmra.mxu0 %v120
    %v255 = vpop.f32.mrf.mxu0
    %v256 = vadd.f32 %v84, %v255
    %v257 = vpop.f32.mrf.mxu0
    %258 = vmatprep.mubr.f32.mxu0 0.0
    %259 = vmatmul.mubr.f32.gmra.mxu0 %v123
    %v260 = vpop.f32.mrf.mxu0
    %v261 = vadd.f32 %v84, %v260
    %v262 = vpop.f32.mrf.mxu0
    %263 = vmatprep.mubr.f32.mxu0 0.0
    %264 = vmatmul.mubr.f32.gmra.mxu0 %v126
    %v265 = vpop.f32.mrf.mxu0
    %v266 = vadd.f32 %v84, %v265
    %v267 = vpop.f32.mrf.mxu0
    %268 = vmatprep.mubr.f32.mxu0 0.0
    %269 = vmatmul.mubr.f32.gmra.mxu0 %v129
    %v270 = vpop.f32.mrf.mxu0
    %v271 = vadd.f32 %v84, %v270
    %v272 = vpop.f32.mrf.mxu0
    %273 = vmatprep.mubr.f32.mxu0 0.0
    %274 = vmatmul.mubr.f32.gmra.mxu0 %v132
    %v275 = vpop.f32.mrf.mxu0
    %v276 = vadd.f32 %v84, %v275
    %v277 = vpop.f32.mrf.mxu0
    %278 = vdwg.mxu0
    %v279 = vmax.f32 %v201, 0.0
    %v280 = vmax.f32 %v206, 0.0
    %v281 = vmax.f32 %v211, 0.0
    %v282 = vmax.f32 %v216, 0.0
    %v283 = vmax.f32 %v221, 0.0
    %v284 = vmax.f32 %v226, 0.0
    %v285 = vmax.f32 %v231, 0.0
    %v286 = vmax.f32 %v236, 0.0
    %v287 = vmax.f32 %v241, 0.0
    %v288 = vmax.f32 %v246, 0.0
    %v289 = vmax.f32 %v251, 0.0
    %v290 = vmax.f32 %v256, 0.0
    %v291 = vmax.f32 %v261, 0.0
    %v292 = vmax.f32 %v266, 0.0
    %v293 = vmax.f32 %v271, 0.0
    %v294 = vmax.f32 %v276, 0.0
    %v295 = vlaneseq
    %v296 = vshrl.u32 %v295, 7
    %v297 = vsub.s32 0, %v296
    %v298 = vrot.slane %v63, %v297
    %299 = vmatprep.subr.mxu0 0.0
    %300 = vmatpush1.msra.mxu0 %v62
    %301 = vmatprep.subr.mxu0 0.0
    %302 = vmatpush1.msra.mxu0 %v61
    %303 = vmatprep.subr.mxu0 0.0
    %304 = vmatpush1.msra.mxu0 %v60
    %305 = vmatprep.subr.mxu0 0.0
    %306 = vmatpush1.msra.mxu0 %v59
    %307 = vmatprep.subr.mxu0 0.0
    %308 = vmatpush1.msra.mxu0 %v58
    %309 = vmatprep.subr.mxu0 0.0
    %310 = vmatpush1.msra.mxu0 %v57
    %311 = vmatprep.subr.mxu0 0.0
    %312 = vmatpush1.msra.mxu0 %v56
    %313 = vmatprep.subr.mxu0 0.0
    %314 = vmatpush1.msra.mxu0 %v55
    %315 = vmatprep.subr.mxu0 0.0
    %316 = vmatpush1.msra.mxu0 %v54
    %317 = vmatprep.subr.mxu0 0.0
    %318 = vmatpush1.msra.mxu0 %v53
    %319 = vmatprep.subr.mxu0 0.0
    %320 = vmatpush1.msra.mxu0 %v52
    %321 = vmatprep.subr.mxu0 0.0
    %322 = vmatpush1.msra.mxu0 %v51
    %323 = vmatprep.subr.mxu0 0.0
    %324 = vmatpush1.msra.mxu0 %v50
    %325 = vmatprep.subr.mxu0 0.0
    %326 = vmatpush1.msra.mxu0 %v49
    %327 = vmatprep.subr.mxu0 0.0
    %328 = vmatpush1.msra.mxu0 %v48
    %329 = vmatprep.subr.mxu0 0.0
    %330 = vmatpush1.msra.mxu0 %v47
    %331 = vmatprep.subr.mxu0 0.0
    %332 = vmatpush2.msra.mxu0 0.0
    %333 = vmatprep.subr.mxu0 0.0
    %334 = vmatpush2.msra.mxu0 0.0
    %335 = vmatprep.subr.mxu0 0.0
    %336 = vmatpush2.msra.mxu0 0.0
    %337 = vmatprep.subr.mxu0 0.0
    %338 = vmatpush2.msra.mxu0 0.0
    %339 = vmatprep.subr.mxu0 0.0
    %340 = vmatpush2.msra.mxu0 0.0
    %341 = vmatprep.subr.mxu0 0.0
    %342 = vmatpush2.msra.mxu0 0.0
    %343 = vmatprep.subr.mxu0 0.0
    %344 = vmatpush2.msra.mxu0 0.0
    %345 = vmatprep.subr.mxu0 0.0
    %346 = vmatpush2.msra.mxu0 0.0
    %347 = vmatprep.subr.mxu0 0.0
    %348 = vmatpush2.msra.mxu0 0.0
    %349 = vmatprep.subr.mxu0 0.0
    %350 = vmatpush2.msra.mxu0 0.0
    %351 = vmatprep.subr.mxu0 0.0
    %352 = vmatpush2.msra.mxu0 0.0
    %353 = vmatprep.subr.mxu0 0.0
    %354 = vmatpush2.msra.mxu0 0.0
    %355 = vmatprep.subr.mxu0 0.0
    %356 = vmatpush2.msra.mxu0 0.0
    %357 = vmatprep.subr.mxu0 0.0
    %358 = vmatpush2.msra.mxu0 0.0
    %359 = vmatprep.subr.mxu0 0.0
    %360 = vmatpush2.msra.mxu0 0.0
    %361 = vmatprep.subr.mxu0 0.0
    %362 = vmatpush2.msra.mxu0 0.0
    %363 = vmatprep.mubr.f32.mxu0 0.0
    %364 = vmatmul.mubr.f32.gmra.mxu0 %v279
    %v365 = vpop.f32.mrf.mxu0
    %v366 = vadd.f32 %v298, %v365
    %v367 = vpop.f32.mrf.mxu0
    %368 = vmatprep.mubr.f32.mxu0 0.0
    %369 = vmatmul.mubr.f32.gmra.mxu0 %v280
    %v370 = vpop.f32.mrf.mxu0
    %v371 = vadd.f32 %v298, %v370
    %v372 = vpop.f32.mrf.mxu0
    %373 = vmatprep.mubr.f32.mxu0 0.0
    %374 = vmatmul.mubr.f32.gmra.mxu0 %v281
    %v375 = vpop.f32.mrf.mxu0
    %v376 = vadd.f32 %v298, %v375
    %v377 = vpop.f32.mrf.mxu0
    %378 = vmatprep.mubr.f32.mxu0 0.0
    %379 = vmatmul.mubr.f32.gmra.mxu0 %v282
    %v380 = vpop.f32.mrf.mxu0
    %v381 = vadd.f32 %v298, %v380
    %v382 = vpop.f32.mrf.mxu0
    %383 = vmatprep.mubr.f32.mxu0 0.0
    %384 = vmatmul.mubr.f32.gmra.mxu0 %v283
    %v385 = vpop.f32.mrf.mxu0
    %v386 = vadd.f32 %v298, %v385
    %v387 = vpop.f32.mrf.mxu0
    %388 = vmatprep.mubr.f32.mxu0 0.0
    %389 = vmatmul.mubr.f32.gmra.mxu0 %v284
    %v390 = vpop.f32.mrf.mxu0
    %v391 = vadd.f32 %v298, %v390
    %v392 = vpop.f32.mrf.mxu0
    %393 = vmatprep.mubr.f32.mxu0 0.0
    %394 = vmatmul.mubr.f32.gmra.mxu0 %v285
    %v395 = vpop.f32.mrf.mxu0
    %v396 = vadd.f32 %v298, %v395
    %v397 = vpop.f32.mrf.mxu0
    %398 = vmatprep.mubr.f32.mxu0 0.0
    %399 = vmatmul.mubr.f32.gmra.mxu0 %v286
    %v400 = vpop.f32.mrf.mxu0
    %v401 = vadd.f32 %v298, %v400
    %v402 = vpop.f32.mrf.mxu0
    %403 = vmatprep.mubr.f32.mxu0 0.0
    %404 = vmatmul.mubr.f32.gmra.mxu0 %v287
    %v405 = vpop.f32.mrf.mxu0
    %v406 = vadd.f32 %v298, %v405
    %v407 = vpop.f32.mrf.mxu0
    %408 = vmatprep.mubr.f32.mxu0 0.0
    %409 = vmatmul.mubr.f32.gmra.mxu0 %v288
    %v410 = vpop.f32.mrf.mxu0
    %v411 = vadd.f32 %v298, %v410
    %v412 = vpop.f32.mrf.mxu0
    %413 = vmatprep.mubr.f32.mxu0 0.0
    %414 = vmatmul.mubr.f32.gmra.mxu0 %v289
    %v415 = vpop.f32.mrf.mxu0
    %v416 = vadd.f32 %v298, %v415
    %v417 = vpop.f32.mrf.mxu0
    %418 = vmatprep.mubr.f32.mxu0 0.0
    %419 = vmatmul.mubr.f32.gmra.mxu0 %v290
    %v420 = vpop.f32.mrf.mxu0
    %v421 = vadd.f32 %v298, %v420
    %v422 = vpop.f32.mrf.mxu0
    %423 = vmatprep.mubr.f32.mxu0 0.0
    %424 = vmatmul.mubr.f32.gmra.mxu0 %v291
    %v425 = vpop.f32.mrf.mxu0
    %v426 = vadd.f32 %v298, %v425
    %v427 = vpop.f32.mrf.mxu0
    %428 = vmatprep.mubr.f32.mxu0 0.0
    %429 = vmatmul.mubr.f32.gmra.mxu0 %v292
    %v430 = vpop.f32.mrf.mxu0
    %v431 = vadd.f32 %v298, %v430
    %v432 = vpop.f32.mrf.mxu0
    %433 = vmatprep.mubr.f32.mxu0 0.0
    %434 = vmatmul.mubr.f32.gmra.mxu0 %v293
    %v435 = vpop.f32.mrf.mxu0
    %v436 = vadd.f32 %v298, %v435
    %v437 = vpop.f32.mrf.mxu0
    %438 = vmatprep.mubr.f32.mxu0 0.0
    %439 = vmatmul.mubr.f32.gmra.mxu0 %v294
    %v440 = vpop.f32.mrf.mxu0
    %v441 = vadd.f32 %v298, %v440
    %v442 = vpop.f32.mrf.mxu0
    %443 = vdwg.mxu0
    %v444 = vmax.f32 %v366, 0.0
    %v445 = vmax.f32 %v371, 0.0
    %v446 = vmax.f32 %v376, 0.0
    %v447 = vmax.f32 %v381, 0.0
    %v448 = vmax.f32 %v386, 0.0
    %v449 = vmax.f32 %v391, 0.0
    %v450 = vmax.f32 %v396, 0.0
    %v451 = vmax.f32 %v401, 0.0
    %v452 = vmax.f32 %v406, 0.0
    %v453 = vmax.f32 %v411, 0.0
    %v454 = vmax.f32 %v416, 0.0
    %v455 = vmax.f32 %v421, 0.0
    %v456 = vmax.f32 %v426, 0.0
    %v457 = vmax.f32 %v431, 0.0
    %v458 = vmax.f32 %v436, 0.0
    %v459 = vmax.f32 %v441, 0.0
    %v460 = vlaneseq
    %v461 = vshrl.u32 %v460, 7
    %v462 = vsub.s32 0, %v461
    %v463 = vrot.slane %v80, %v462
    %464 = vmatprep.subr.mxu0 0.0
    %465 = vmatpush1.msra.mxu0 %v79
    %466 = vmatprep.subr.mxu0 0.0
    %467 = vmatpush1.msra.mxu0 %v78
    %468 = vmatprep.subr.mxu0 0.0
    %469 = vmatpush1.msra.mxu0 %v77
    %470 = vmatprep.subr.mxu0 0.0
    %471 = vmatpush1.msra.mxu0 %v76
    %472 = vmatprep.subr.mxu0 0.0
    %473 = vmatpush1.msra.mxu0 %v75
    %474 = vmatprep.subr.mxu0 0.0
    %475 = vmatpush1.msra.mxu0 %v74
    %476 = vmatprep.subr.mxu0 0.0
    %477 = vmatpush1.msra.mxu0 %v73
    %478 = vmatprep.subr.mxu0 0.0
    %479 = vmatpush1.msra.mxu0 %v72
    %480 = vmatprep.subr.mxu0 0.0
    %481 = vmatpush1.msra.mxu0 %v71
    %482 = vmatprep.subr.mxu0 0.0
    %483 = vmatpush1.msra.mxu0 %v70
    %484 = vmatprep.subr.mxu0 0.0
    %485 = vmatpush1.msra.mxu0 %v69
    %486 = vmatprep.subr.mxu0 0.0
    %487 = vmatpush1.msra.mxu0 %v68
    %488 = vmatprep.subr.mxu0 0.0
    %489 = vmatpush1.msra.mxu0 %v67
    %490 = vmatprep.subr.mxu0 0.0
    %491 = vmatpush1.msra.mxu0 %v66
    %492 = vmatprep.subr.mxu0 0.0
    %493 = vmatpush1.msra.mxu0 %v65
    %494 = vmatprep.subr.mxu0 0.0
    %495 = vmatpush1.msra.mxu0 %v64
    %496 = vmatprep.subr.mxu0 0.0
    %497 = vmatpush2.msra.mxu0 0.0
    %498 = vmatprep.subr.mxu0 0.0
    %499 = vmatpush2.msra.mxu0 0.0
    %500 = vmatprep.subr.mxu0 0.0
    %501 = vmatpush2.msra.mxu0 0.0
    %502 = vmatprep.subr.mxu0 0.0
    %503 = vmatpush2.msra.mxu0 0.0
    %504 = vmatprep.subr.mxu0 0.0
    %505 = vmatpush2.msra.mxu0 0.0
    %506 = vmatprep.subr.mxu0 0.0
    %507 = vmatpush2.msra.mxu0 0.0
    %508 = vmatprep.subr.mxu0 0.0
    %509 = vmatpush2.msra.mxu0 0.0
    %510 = vmatprep.subr.mxu0 0.0
    %511 = vmatpush2.msra.mxu0 0.0
    %512 = vmatprep.subr.mxu0 0.0
    %513 = vmatpush2.msra.mxu0 0.0
    %514 = vmatprep.subr.mxu0 0.0
    %515 = vmatpush2.msra.mxu0 0.0
    %516 = vmatprep.subr.mxu0 0.0
    %517 = vmatpush2.msra.mxu0 0.0
    %518 = vmatprep.subr.mxu0 0.0
    %519 = vmatpush2.msra.mxu0 0.0
    %520 = vmatprep.subr.mxu0 0.0
    %521 = vmatpush2.msra.mxu0 0.0
    %522 = vmatprep.subr.mxu0 0.0
    %523 = vmatpush2.msra.mxu0 0.0
    %524 = vmatprep.subr.mxu0 0.0
    %525 = vmatpush2.msra.mxu0 0.0
    %526 = vmatprep.subr.mxu0 0.0
    %527 = vmatpush2.msra.mxu0 0.0
    %528 = vmatprep.mubr.f32.mxu0 0.0
    %529 = vmatmul.mubr.f32.gmra.mxu0 %v444
    %v530 = vpop.f32.mrf.mxu0
    %v531 = vadd.f32 %v463, %v530
    %v532 = vpop.f32.mrf.mxu0
    %533 = vmatprep.mubr.f32.mxu0 0.0
    %534 = vmatmul.mubr.f32.gmra.mxu0 %v445
    %v535 = vpop.f32.mrf.mxu0
    %v536 = vadd.f32 %v463, %v535
    %v537 = vpop.f32.mrf.mxu0
    %538 = vmatprep.mubr.f32.mxu0 0.0
    %539 = vmatmul.mubr.f32.gmra.mxu0 %v446
    %v540 = vpop.f32.mrf.mxu0
    %v541 = vadd.f32 %v463, %v540
    %v542 = vpop.f32.mrf.mxu0
    %543 = vmatprep.mubr.f32.mxu0 0.0
    %544 = vmatmul.mubr.f32.gmra.mxu0 %v447
    %v545 = vpop.f32.mrf.mxu0
    %v546 = vadd.f32 %v463, %v545
    %v547 = vpop.f32.mrf.mxu0
    %548 = vmatprep.mubr.f32.mxu0 0.0
    %549 = vmatmul.mubr.f32.gmra.mxu0 %v448
    %v550 = vpop.f32.mrf.mxu0
    %v551 = vadd.f32 %v463, %v550
    %v552 = vpop.f32.mrf.mxu0
    %553 = vmatprep.mubr.f32.mxu0 0.0
    %554 = vmatmul.mubr.f32.gmra.mxu0 %v449
    %v555 = vpop.f32.mrf.mxu0
    %v556 = vadd.f32 %v463, %v555
    %v557 = vpop.f32.mrf.mxu0
    %558 = vmatprep.mubr.f32.mxu0 0.0
    %559 = vmatmul.mubr.f32.gmra.mxu0 %v450
    %v560 = vpop.f32.mrf.mxu0
    %v561 = vadd.f32 %v463, %v560
    %v562 = vpop.f32.mrf.mxu0
    %563 = vmatprep.mubr.f32.mxu0 0.0
    %564 = vmatmul.mubr.f32.gmra.mxu0 %v451
    %v565 = vpop.f32.mrf.mxu0
    %v566 = vadd.f32 %v463, %v565
    %v567 = vpop.f32.mrf.mxu0
    %568 = vmatprep.mubr.f32.mxu0 0.0
    %569 = vmatmul.mubr.f32.gmra.mxu0 %v452
    %v570 = vpop.f32.mrf.mxu0
    %v571 = vadd.f32 %v463, %v570
    %v572 = vpop.f32.mrf.mxu0
    %573 = vmatprep.mubr.f32.mxu0 0.0
    %574 = vmatmul.mubr.f32.gmra.mxu0 %v453
    %v575 = vpop.f32.mrf.mxu0
    %v576 = vadd.f32 %v463, %v575
    %v577 = vpop.f32.mrf.mxu0
    %578 = vmatprep.mubr.f32.mxu0 0.0
    %579 = vmatmul.mubr.f32.gmra.mxu0 %v454
    %v580 = vpop.f32.mrf.mxu0
    %v581 = vadd.f32 %v463, %v580
    %v582 = vpop.f32.mrf.mxu0
    %583 = vmatprep.mubr.f32.mxu0 0.0
    %584 = vmatmul.mubr.f32.gmra.mxu0 %v455
    %v585 = vpop.f32.mrf.mxu0
    %v586 = vadd.f32 %v463, %v585
    %v587 = vpop.f32.mrf.mxu0
    %588 = vmatprep.mubr.f32.mxu0 0.0
    %589 = vmatmul.mubr.f32.gmra.mxu0 %v456
    %v590 = vpop.f32.mrf.mxu0
    %v591 = vadd.f32 %v463, %v590
    %v592 = vpop.f32.mrf.mxu0
    %593 = vmatprep.mubr.f32.mxu0 0.0
    %594 = vmatmul.mubr.f32.gmra.mxu0 %v457
    %v595 = vpop.f32.mrf.mxu0
    %v596 = vadd.f32 %v463, %v595
    %v597 = vpop.f32.mrf.mxu0
    %598 = vmatprep.mubr.f32.mxu0 0.0
    %599 = vmatmul.mubr.f32.gmra.mxu0 %v458
    %v600 = vpop.f32.mrf.mxu0
    %v601 = vadd.f32 %v463, %v600
    %v602 = vpop.f32.mrf.mxu0
    %603 = vmatprep.mubr.f32.mxu0 0.0
    %604 = vmatmul.mubr.f32.gmra.mxu0 %v459
    %v605 = vpop.f32.mrf.mxu0
    %v606 = vadd.f32 %v463, %v605
    %v607 = vpop.f32.mrf.mxu0
    %608 = vdwg.mxu0
    %609 = vxpose.xlu0.b32.start [1/16] %v531, 128
    %610 = vxpose.xlu0.b32.cont [2/16] %v536, 128
    %611 = vxpose.xlu0.b32.cont [3/16] %v541, 128
    %612 = vxpose.xlu0.b32.cont [4/16] %v546, 128
    %613 = vxpose.xlu0.b32.cont [5/16] %v551, 128
    %614 = vxpose.xlu0.b32.cont [6/16] %v556, 128
    %615 = vxpose.xlu0.b32.cont [7/16] %v561, 128
    %616 = vxpose.xlu0.b32.cont [8/16] %v566, 128
    %617 = vxpose.xlu0.b32.cont [9/16] %v571, 128
    %618 = vxpose.xlu0.b32.cont [10/16] %v576, 128
    %619 = vxpose.xlu0.b32.cont [11/16] %v581, 128
    %620 = vxpose.xlu0.b32.cont [12/16] %v586, 128
    %621 = vxpose.xlu0.b32.cont [13/16] %v591, 128
    %622 = vxpose.xlu0.b32.cont [14/16] %v596, 128
    %623 = vxpose.xlu0.b32.cont [15/16] %v601, 128
    %624 = vxpose.xlu0.b32.end [16/16] %v606, 128
    %v625 = vpop.trf.xlu0
    %v626 = vpop.trf.xlu0
    %v627 = vpop.trf.xlu0
    %v628 = vpop.trf.xlu0
    %v629 = vpop.trf.xlu0
    %v630 = vpop.trf.xlu0
    %v631 = vpop.trf.xlu0
    %v632 = vpop.trf.xlu0
    %v633 = vpop.trf.xlu0
    %v634 = vpop.trf.xlu0
    %v635 = vpop.trf.xlu0
    %v636 = vpop.trf.xlu0
    %v637 = vpop.trf.xlu0
    %v638 = vpop.trf.xlu0
    %v639 = vpop.trf.xlu0
    %v640 = vpop.trf.xlu0
    %v641 = vsub.f32 0.0, %v625
    %v642 = vmul.f32 %v641, 1.442695
    %v643 = vpow.pop %v642
    %v644 = vadd.f32 %v643, 1.0
    %v645 = vrcp.pop %v644
    %v646 = vmul.f32 1.0, %v645
    %647 = vst [vmem:[#allocation5] sm:$0xff] %v646
    // Predicated region
    $region14: #{tpu_custom_call.1} parent=1 // pred_check
      _
    $region15: #{tpu_custom_call.1} parent=1 // pred_check_branch
      %649 = sbr.rel (0) target = $region17
    $region16: #{tpu_custom_call.1} parent=1 // pred_region
      %s651 = ssub.s32 128, 128
      %652 = vsyncadd [#allocation4], %s651
      %s654 = sshll.u32 [#allocation5], 4
      %s655 = int_to_ptr.vmem [resolvable:$true] %s654
      %657 = dma.vmem_to_hbm [thread:$0]  %s655, 128, %s2, [#allocation4]
    $region17: #{tpu_custom_call.1} parent=1 // pred_fallthru
      _
    // Predicated region
    $region18: #{tpu_custom_call.1} parent=1 // pred_check
      _
    $region19: #{tpu_custom_call.1} parent=1 // pred_check_branch
      %659 = sbr.rel (0) target = $region21
    $region20: #{tpu_custom_call.1} parent=1 // pred_region
      %660 = dma.done [#allocation4], 128
    $region21: #{tpu_custom_call.1} parent=1 // pred_fallthru
      _
    %661 = vsyncpa [#allocation3], 1
    %662 = vsyncpa [#allocation4], 1

</llo_original>
